<compile_context>
chip_gen: v5e
topology: v5e:2x2
jax: 0.10.0
libtpu: 0.0.40
codegen_flags: <defaults>
</compile_context>

<pallas_src>
import jax
import jax.numpy as jnp
from jax.experimental import pallas as pl
from jax.experimental.pallas import tpu as pltpu


def _loss_kernel(R_ref, T_ref, gtR_ref, gtT_ref, cos_ref, tnorm_ref):
    # R_ref:(K*9, S, 128)  T_ref:(K*3, S, 128)  gtR_ref:(9, S, 128)  gtT_ref:(3, S, 128)
    # cos_ref / tnorm_ref: (S, 128)
    K = R_ref.shape[0] // 9

    # Lazy row reads: let regalloc re-load from VMEM instead of spilling vregs.
    def r(k, i, j):          # R_k[:, i, j] -> (S, 128)
        return R_ref[k * 9 + 3 * i + j]

    def tv(k, j):            # t_k[:, j]    -> (S, 128)
        return T_ref[k * 3 + j]

    def gr(i, j):            # gt_R[:, i, j]-> (S, 128)
        return gtR_ref[3 * i + j]

    # ---- RotMatMetric: R_final = R_{K-1} @ ... @ R_0 (initialize to R_0) ----
    rf = [[r(0, i, j) for j in range(3)] for i in range(3)]
    for k in range(1, K):
        rf = [[r(k, i, 0) * rf[0][j] + r(k, i, 1) * rf[1][j] + r(k, i, 2) * rf[2][j]
               for j in range(3)]
              for i in range(3)]

    a, b, c = rf[0]
    d, e, f = rf[1]
    g, h, i9 = rf[2]
    # cofactors of R_final (inv(R) = cof(R)^T / det)
    c00 = e * i9 - f * h
    c01 = f * g - d * i9
    c02 = d * h - e * g
    c10 = c * h - b * i9
    c11 = a * i9 - c * g
    c12 = b * g - a * h
    c20 = b * f - c * e
    c21 = c * d - a * f
    c22 = a * e - b * d
    det = a * c00 + b * c01 + c * c02
    inv_det = pl.reciprocal(det, approx=True)   # EUP slot, ~free

    # trace(inv(R_final) @ gt_R) = <cof(R_final), gt_R>_F / det   (inv_det factored out)
    tr_adj = (c00 * gr(0, 0) + c01 * gr(0, 1) + c02 * gr(0, 2)
              + c10 * gr(1, 0) + c11 * gr(1, 1) + c12 * gr(1, 2)
              + c20 * gr(2, 0) + c21 * gr(2, 1) + c22 * gr(2, 2))
    cos_ref[...] = (tr_adj * inv_det - 1.0) * 0.5

    # ---- TransMetric: exact O(K) recurrence  tf <- R_k @ (tf + t_{k-1}) ----
    zero = jnp.zeros(cos_ref.shape, jnp.float32)
    tf = [zero, zero, zero]
    for k in range(1, K):
        v0 = tf[0] + tv(k - 1, 0)
        v1 = tf[1] + tv(k - 1, 1)
        v2 = tf[2] + tv(k - 1, 2)
        tf = [r(k, 0, 0) * v0 + r(k, 0, 1) * v1 + r(k, 0, 2) * v2,
              r(k, 1, 0) * v0 + r(k, 1, 1) * v1 + r(k, 1, 2) * v2,
              r(k, 2, 0) * v0 + r(k, 2, 1) * v1 + r(k, 2, 2) * v2]
    tf = [tf[j] + tv(K - 1, j) for j in range(3)]

    dx = gtT_ref[0] - tf[0]
    dy = gtT_ref[1] - tf[1]
    dz = gtT_ref[2] - tf[2]
    tnorm_ref[...] = jnp.sqrt(dx * dx + dy * dy + dz * dz)


def _choose_tile_sub(n_sub_needed, K, max_tile_sub):
    """Pick the number of sublane rows (of 128 lanes) per grid step."""
    # Per-sublane-row footprint across all in/out arrays, double buffered.
    row_bytes = (12 * K + 14) * 128 * 4
    budget = 8 << 20          # conservative: fits v5e's 16 MiB scoped default with headroom
    t = min(int(max_tile_sub), max(8, budget // (2 * row_bytes)))
    t = max(8, t - t % 8)     # multiple of 8 sublanes
    if n_sub_needed <= t:
        return n_sub_needed   # single block spanning the full (possibly <8) sublane dim
    return t


def custom_loss_optim_rt(pred_trans_mats, pred_rot_mats, gt_trans_mat, gt_rot_mat,
                         *, max_tile_sub=64):
    """Equivalent of CustomLossOptimRt.forward (returns the scalar total loss)."""
    K = len(pred_rot_mats)
    N = int(gt_rot_mat.shape[0])

    n_sub_needed = pl.cdiv(N, 128)
    tile_sub = _choose_tile_sub(n_sub_needed, K, max_tile_sub)
    n_sub = pl.cdiv(n_sub_needed, tile_sub) * tile_sub
    N_pad = n_sub * 128
    pad = N_pad - N
    grid = (n_sub // tile_sub,)

    # ---- AoS -> SoA packing: batch on lanes, quantity index on the leading axis ----
    # TODO(synk): ideally the upstream producer emits this SoA layout directly; the
    # transpose below re-streams the (small) inputs through HBM one extra time.
    def soa(x):
        # (..., N, rows) -> (prod(...)*rows, n_sub, 128)
        x = jnp.moveaxis(x, -1, -2).reshape(-1, N)
        if pad:
            x = jnp.pad(x, ((0, 0), (0, pad)))
        return x.reshape(-1, n_sub, 128)

    R = jnp.stack([m.astype(jnp.float32).reshape(N, 9) for m in pred_rot_mats], 0)
    T = jnp.stack([m.astype(jnp.float32) for m in pred_trans_mats], 0)
    R_soa = soa(R)                                                  # (K*9, n_sub, 128)
    T_soa = soa(T)                                                  # (K*3, n_sub, 128)
    gtR_soa = soa(gt_rot_mat.astype(jnp.float32).reshape(N, 9))     # (9,   n_sub, 128)
    gtT_soa = soa(gt_trans_mat.astype(jnp.float32))                 # (3,   n_sub, 128)

    cos_theta, tnorm = pl.pallas_call(
        _loss_kernel,
        out_shape=(jax.ShapeDtypeStruct((n_sub, 128), jnp.float32),
                   jax.ShapeDtypeStruct((n_sub, 128), jnp.float32)),
        grid_spec=pltpu.PrefetchScalarGridSpec(
            num_scalar_prefetch=0,
            grid=grid,
            in_specs=[
                pl.BlockSpec((K * 9, tile_sub, 128), lambda i: (0, i, 0)),
                pl.BlockSpec((K * 3, tile_sub, 128), lambda i: (0, i, 0)),
                pl.BlockSpec((9, tile_sub, 128), lambda i: (0, i, 0)),
                pl.BlockSpec((3, tile_sub, 128), lambda i: (0, i, 0)),
            ],
            out_specs=(pl.BlockSpec((tile_sub, 128), lambda i: (i, 0)),
                       pl.BlockSpec((tile_sub, 128), lambda i: (i, 0))),
        ),
        compiler_params=pltpu.CompilerParams(
            dimension_semantics=("parallel",)),   # v7x: shard batch tiles over 2 TCs
    )(R_soa, T_soa, gtR_soa, gtT_soa)

    # N-scalar tail in JAX glue; slice off padded lanes BEFORE arccos / means.
    cos_flat = cos_theta.reshape(-1)[:N]
    tnorm_flat = tnorm.reshape(-1)[:N]
    cos_flat = jnp.clip(cos_flat, -1.0, 1.0)      # guard arccos against fp drift
    loss_R = jnp.mean(jnp.arccos(cos_flat))
    loss_t = jnp.mean(tnorm_flat)
    return 0.5 * loss_R + 0.5 * loss_t


# ---------------- pure-JAX reference (mirrors the PyTorch code) ----------------
def _reference(pred_trans_mats, pred_rot_mats, gt_trans_mat, gt_rot_mat):
    N = gt_rot_mat.shape[0]
    R_final = jnp.broadcast_to(jnp.eye(3, dtype=jnp.float32), (N, 3, 3))
    for Rk in pred_rot_mats:
        R_final = jnp.matmul(Rk, R_final)
    M = jnp.matmul(jnp.linalg.inv(R_final), gt_rot_mat)
    tr = jnp.trace(M, axis1=-2, axis2=-1)
    loss_R = jnp.mean(jnp.arccos((tr - 1.0) / 2.0))

    t_final = jnp.zeros_like(gt_trans_mat)
    K = len(pred_rot_mats)
    for i in range(1, K):
        v = pred_trans_mats[i - 1][:, :, None]
        for Rk in pred_rot_mats[i:]:
            v = jnp.matmul(Rk, v)
        t_final = t_final + v[:, :, 0]
    t_final = t_final + pred_trans_mats[-1]
    loss_t = jnp.mean(jnp.linalg.norm(gt_trans_mat - t_final, axis=1))
    return 0.5 * loss_R + 0.5 * loss_t


def _rot_from_angles(angles):
    """Deterministic batch of proper rotation matrices from Euler angles (N,3)."""
    a, b, c = angles[:, 0], angles[:, 1], angles[:, 2]
    ca, sa = jnp.cos(a), jnp.sin(a)
    cb, sb = jnp.cos(b), jnp.sin(b)
    cc, sc = jnp.cos(c), jnp.sin(c)
    z = jnp.zeros_like(a)
    o = jnp.ones_like(a)
    Rz = jnp.stack([ca, -sa, z, sa, ca, z, z, z, o], -1).reshape(-1, 3, 3)
    Ry = jnp.stack([cb, z, sb, z, o, z, -sb, z, cb], -1).reshape(-1, 3, 3)
    Rx = jnp.stack([o, z, z, z, cc, -sc, z, sc, cc], -1).reshape(-1, 3, 3)
    return jnp.matmul(Rz, jnp.matmul(Ry, Rx)).astype(jnp.float32)


def _make_inputs(key, N, K):
    keys = jax.random.split(key, 2 * K + 2)
    pred_rot_mats = [
        _rot_from_angles(jax.random.uniform(keys[k], (N, 3), minval=-jnp.pi, maxval=jnp.pi))
        for k in range(K)
    ]
    pred_trans_mats = [
        (0.1 * jax.random.normal(keys[K + k], (N, 3))).astype(jnp.float32)
        for k in range(K)
    ]
    gt_rot_mat = _rot_from_angles(
        jax.random.uniform(keys[2 * K], (N, 3), minval=-jnp.pi, maxval=jnp.pi))
    gt_trans_mat = (0.1 * jax.random.normal(keys[2 * K + 1], (N, 3))).astype(jnp.float32)
    return pred_trans_mats, pred_rot_mats, gt_trans_mat, gt_rot_mat


if __name__ == "__main__":
    key = jax.random.PRNGKey(0)
    k1, k2 = jax.random.split(key)

    # Primary small test: N=8 point-sets, K=3 refinement stages (pad + single block).
    pt, pr, gt_t, gt_r = _make_inputs(k1, N=8, K=3)
    total = jax.block_until_ready(custom_loss_optim_rt(pt, pr, gt_t, gt_r))
    ref = jax.block_until_ready(_reference(pt, pr, gt_t, gt_r))
    assert bool(jnp.isfinite(total)), f"non-finite loss: {total}"
    assert abs(float(total) - float(ref)) < 1e-2, (float(total), float(ref))

    # Second test: exercises padding + a >1 grid (forced small batch tile).
    pt2, pr2, gt_t2, gt_r2 = _make_inputs(k2, N=2000, K=2)
    total2 = jax.block_until_ready(
        custom_loss_optim_rt(pt2, pr2, gt_t2, gt_r2, max_tile_sub=8))
    ref2 = jax.block_until_ready(_reference(pt2, pr2, gt_t2, gt_r2))
    assert bool(jnp.isfinite(total2)), f"non-finite loss: {total2}"
    assert abs(float(total2) - float(ref2)) < 1e-2, (float(total2), float(ref2))

    print("KERNEL_OK")
</pallas_src>

<mosaic_0001>
module attributes {stable_mosaic.version = 11 : i64} {
  func.func @_loss_kernel(%arg0: i32, %arg1: memref<27x1x128xf32, #tpu.memory_space<vmem>>, %arg2: memref<9x1x128xf32, #tpu.memory_space<vmem>>, %arg3: memref<9x1x128xf32, #tpu.memory_space<vmem>>, %arg4: memref<3x1x128xf32, #tpu.memory_space<vmem>>, %arg5: memref<1x128xf32, #tpu.memory_space<vmem>>, %arg6: memref<1x128xf32, #tpu.memory_space<vmem>>) attributes {dimension_semantics = [#tpu.dimension_semantics<parallel>], iteration_bounds = array<i64: 1>, scalar_prefetch = 0 : i64, scratch_operands = 0 : i64, tpu.core_type = #tpu.core_type<tc>, window_params = [{transform_indices = @transform_0, window_bounds = array<i64: 27, 1, 128>}, {transform_indices = @transform_1, window_bounds = array<i64: 9, 1, 128>}, {transform_indices = @transform_2, window_bounds = array<i64: 9, 1, 128>}, {transform_indices = @transform_3, window_bounds = array<i64: 3, 1, 128>}, {transform_indices = @transform_4, window_bounds = array<i64: 1, 128>}, {transform_indices = @transform_5, window_bounds = array<i64: 1, 128>}]} {
    %c0 = arith.constant 0 : index
    %c0_0 = arith.constant 0 : index
    %c0_1 = arith.constant 0 : index
    %0 = vector.load %arg1[%c0, %c0_0, %c0_1] : memref<27x1x128xf32, #tpu.memory_space<vmem>>, vector<1x1x128xf32>
    %1 = vector.shape_cast %0 : vector<1x1x128xf32> to vector<1x128xf32>
    %c1 = arith.constant 1 : index
    %c0_2 = arith.constant 0 : index
    %c0_3 = arith.constant 0 : index
    %2 = vector.load %arg1[%c1, %c0_2, %c0_3] : memref<27x1x128xf32, #tpu.memory_space<vmem>>, vector<1x1x128xf32>
    %3 = vector.shape_cast %2 : vector<1x1x128xf32> to vector<1x128xf32>
    %c2 = arith.constant 2 : index
    %c0_4 = arith.constant 0 : index
    %c0_5 = arith.constant 0 : index
    %4 = vector.load %arg1[%c2, %c0_4, %c0_5] : memref<27x1x128xf32, #tpu.memory_space<vmem>>, vector<1x1x128xf32>
    %5 = vector.shape_cast %4 : vector<1x1x128xf32> to vector<1x128xf32>
    %c3 = arith.constant 3 : index
    %c0_6 = arith.constant 0 : index
    %c0_7 = arith.constant 0 : index
    %6 = vector.load %arg1[%c3, %c0_6, %c0_7] : memref<27x1x128xf32, #tpu.memory_space<vmem>>, vector<1x1x128xf32>
    %7 = vector.shape_cast %6 : vector<1x1x128xf32> to vector<1x128xf32>
    %c4 = arith.constant 4 : index
    %c0_8 = arith.constant 0 : index
    %c0_9 = arith.constant 0 : index
    %8 = vector.load %arg1[%c4, %c0_8, %c0_9] : memref<27x1x128xf32, #tpu.memory_space<vmem>>, vector<1x1x128xf32>
    %9 = vector.shape_cast %8 : vector<1x1x128xf32> to vector<1x128xf32>
    %c5 = arith.constant 5 : index
    %c0_10 = arith.constant 0 : index
    %c0_11 = arith.constant 0 : index
    %10 = vector.load %arg1[%c5, %c0_10, %c0_11] : memref<27x1x128xf32, #tpu.memory_space<vmem>>, vector<1x1x128xf32>
    %11 = vector.shape_cast %10 : vector<1x1x128xf32> to vector<1x128xf32>
    %c6 = arith.constant 6 : index
    %c0_12 = arith.constant 0 : index
    %c0_13 = arith.constant 0 : index
    %12 = vector.load %arg1[%c6, %c0_12, %c0_13] : memref<27x1x128xf32, #tpu.memory_space<vmem>>, vector<1x1x128xf32>
    %13 = vector.shape_cast %12 : vector<1x1x128xf32> to vector<1x128xf32>
    %c7 = arith.constant 7 : index
    %c0_14 = arith.constant 0 : index
    %c0_15 = arith.constant 0 : index
    %14 = vector.load %arg1[%c7, %c0_14, %c0_15] : memref<27x1x128xf32, #tpu.memory_space<vmem>>, vector<1x1x128xf32>
    %15 = vector.shape_cast %14 : vector<1x1x128xf32> to vector<1x128xf32>
    %c8 = arith.constant 8 : index
    %c0_16 = arith.constant 0 : index
    %c0_17 = arith.constant 0 : index
    %16 = vector.load %arg1[%c8, %c0_16, %c0_17] : memref<27x1x128xf32, #tpu.memory_space<vmem>>, vector<1x1x128xf32>
    %17 = vector.shape_cast %16 : vector<1x1x128xf32> to vector<1x128xf32>
    %c9 = arith.constant 9 : index
    %c0_18 = arith.constant 0 : index
    %c0_19 = arith.constant 0 : index
    %18 = vector.load %arg1[%c9, %c0_18, %c0_19] : memref<27x1x128xf32, #tpu.memory_space<vmem>>, vector<1x1x128xf32>
    %19 = vector.shape_cast %18 : vector<1x1x128xf32> to vector<1x128xf32>
    %20 = arith.mulf %19, %1 : vector<1x128xf32>
    %c10 = arith.constant 10 : index
    %c0_20 = arith.constant 0 : index
    %c0_21 = arith.constant 0 : index
    %21 = vector.load %arg1[%c10, %c0_20, %c0_21] : memref<27x1x128xf32, #tpu.memory_space<vmem>>, vector<1x1x128xf32>
    %22 = vector.shape_cast %21 : vector<1x1x128xf32> to vector<1x128xf32>
    %23 = arith.mulf %22, %7 : vector<1x128xf32>
    %24 = arith.addf %20, %23 : vector<1x128xf32>
    %c11 = arith.constant 11 : index
    %c0_22 = arith.constant 0 : index
    %c0_23 = arith.constant 0 : index
    %25 = vector.load %arg1[%c11, %c0_22, %c0_23] : memref<27x1x128xf32, #tpu.memory_space<vmem>>, vector<1x1x128xf32>
    %26 = vector.shape_cast %25 : vector<1x1x128xf32> to vector<1x128xf32>
    %27 = arith.mulf %26, %13 : vector<1x128xf32>
    %28 = arith.addf %24, %27 : vector<1x128xf32>
    %c9_24 = arith.constant 9 : index
    %c0_25 = arith.constant 0 : index
    %c0_26 = arith.constant 0 : index
    %29 = vector.load %arg1[%c9_24, %c0_25, %c0_26] : memref<27x1x128xf32, #tpu.memory_space<vmem>>, vector<1x1x128xf32>
    %30 = vector.shape_cast %29 : vector<1x1x128xf32> to vector<1x128xf32>
    %31 = arith.mulf %30, %3 : vector<1x128xf32>
    %c10_27 = arith.constant 10 : index
    %c0_28 = arith.constant 0 : index
    %c0_29 = arith.constant 0 : index
    %32 = vector.load %arg1[%c10_27, %c0_28, %c0_29] : memref<27x1x128xf32, #tpu.memory_space<vmem>>, vector<1x1x128xf32>
    %33 = vector.shape_cast %32 : vector<1x1x128xf32> to vector<1x128xf32>
    %34 = arith.mulf %33, %9 : vector<1x128xf32>
    %35 = arith.addf %31, %34 : vector<1x128xf32>
    %c11_30 = arith.constant 11 : index
    %c0_31 = arith.constant 0 : index
    %c0_32 = arith.constant 0 : index
    %36 = vector.load %arg1[%c11_30, %c0_31, %c0_32] : memref<27x1x128xf32, #tpu.memory_space<vmem>>, vector<1x1x128xf32>
    %37 = vector.shape_cast %36 : vector<1x1x128xf32> to vector<1x128xf32>
    %38 = arith.mulf %37, %15 : vector<1x128xf32>
    %39 = arith.addf %35, %38 : vector<1x128xf32>
    %c9_33 = arith.constant 9 : index
    %c0_34 = arith.constant 0 : index
    %c0_35 = arith.constant 0 : index
    %40 = vector.load %arg1[%c9_33, %c0_34, %c0_35] : memref<27x1x128xf32, #tpu.memory_space<vmem>>, vector<1x1x128xf32>
    %41 = vector.shape_cast %40 : vector<1x1x128xf32> to vector<1x128xf32>
    %42 = arith.mulf %41, %5 : vector<1x128xf32>
    %c10_36 = arith.constant 10 : index
    %c0_37 = arith.constant 0 : index
    %c0_38 = arith.constant 0 : index
    %43 = vector.load %arg1[%c10_36, %c0_37, %c0_38] : memref<27x1x128xf32, #tpu.memory_space<vmem>>, vector<1x1x128xf32>
    %44 = vector.shape_cast %43 : vector<1x1x128xf32> to vector<1x128xf32>
    %45 = arith.mulf %44, %11 : vector<1x128xf32>
    %46 = arith.addf %42, %45 : vector<1x128xf32>
    %c11_39 = arith.constant 11 : index
    %c0_40 = arith.constant 0 : index
    %c0_41 = arith.constant 0 : index
    %47 = vector.load %arg1[%c11_39, %c0_40, %c0_41] : memref<27x1x128xf32, #tpu.memory_space<vmem>>, vector<1x1x128xf32>
    %48 = vector.shape_cast %47 : vector<1x1x128xf32> to vector<1x128xf32>
    %49 = arith.mulf %48, %17 : vector<1x128xf32>
    %50 = arith.addf %46, %49 : vector<1x128xf32>
    %c12 = arith.constant 12 : index
    %c0_42 = arith.constant 0 : index
    %c0_43 = arith.constant 0 : index
    %51 = vector.load %arg1[%c12, %c0_42, %c0_43] : memref<27x1x128xf32, #tpu.memory_space<vmem>>, vector<1x1x128xf32>
    %52 = vector.shape_cast %51 : vector<1x1x128xf32> to vector<1x128xf32>
    %53 = arith.mulf %52, %1 : vector<1x128xf32>
    %c13 = arith.constant 13 : index
    %c0_44 = arith.constant 0 : index
    %c0_45 = arith.constant 0 : index
    %54 = vector.load %arg1[%c13, %c0_44, %c0_45] : memref<27x1x128xf32, #tpu.memory_space<vmem>>, vector<1x1x128xf32>
    %55 = vector.shape_cast %54 : vector<1x1x128xf32> to vector<1x128xf32>
    %56 = arith.mulf %55, %7 : vector<1x128xf32>
    %57 = arith.addf %53, %56 : vector<1x128xf32>
    %c14 = arith.constant 14 : index
    %c0_46 = arith.constant 0 : index
    %c0_47 = arith.constant 0 : index
    %58 = vector.load %arg1[%c14, %c0_46, %c0_47] : memref<27x1x128xf32, #tpu.memory_space<vmem>>, vector<1x1x128xf32>
    %59 = vector.shape_cast %58 : vector<1x1x128xf32> to vector<1x128xf32>
    %60 = arith.mulf %59, %13 : vector<1x128xf32>
    %61 = arith.addf %57, %60 : vector<1x128xf32>
    %c12_48 = arith.constant 12 : index
    %c0_49 = arith.constant 0 : index
    %c0_50 = arith.constant 0 : index
    %62 = vector.load %arg1[%c12_48, %c0_49, %c0_50] : memref<27x1x128xf32, #tpu.memory_space<vmem>>, vector<1x1x128xf32>
    %63 = vector.shape_cast %62 : vector<1x1x128xf32> to vector<1x128xf32>
    %64 = arith.mulf %63, %3 : vector<1x128xf32>
    %c13_51 = arith.constant 13 : index
    %c0_52 = arith.constant 0 : index
    %c0_53 = arith.constant 0 : index
    %65 = vector.load %arg1[%c13_51, %c0_52, %c0_53] : memref<27x1x128xf32, #tpu.memory_space<vmem>>, vector<1x1x128xf32>
    %66 = vector.shape_cast %65 : vector<1x1x128xf32> to vector<1x128xf32>
    %67 = arith.mulf %66, %9 : vector<1x128xf32>
    %68 = arith.addf %64, %67 : vector<1x128xf32>
    %c14_54 = arith.constant 14 : index
    %c0_55 = arith.constant 0 : index
    %c0_56 = arith.constant 0 : index
    %69 = vector.load %arg1[%c14_54, %c0_55, %c0_56] : memref<27x1x128xf32, #tpu.memory_space<vmem>>, vector<1x1x128xf32>
    %70 = vector.shape_cast %69 : vector<1x1x128xf32> to vector<1x128xf32>
    %71 = arith.mulf %70, %15 : vector<1x128xf32>
    %72 = arith.addf %68, %71 : vector<1x128xf32>
    %c12_57 = arith.constant 12 : index
    %c0_58 = arith.constant 0 : index
    %c0_59 = arith.constant 0 : index
    %73 = vector.load %arg1[%c12_57, %c0_58, %c0_59] : memref<27x1x128xf32, #tpu.memory_space<vmem>>, vector<1x1x128xf32>
    %74 = vector.shape_cast %73 : vector<1x1x128xf32> to vector<1x128xf32>
    %75 = arith.mulf %74, %5 : vector<1x128xf32>
    %c13_60 = arith.constant 13 : index
    %c0_61 = arith.constant 0 : index
    %c0_62 = arith.constant 0 : index
    %76 = vector.load %arg1[%c13_60, %c0_61, %c0_62] : memref<27x1x128xf32, #tpu.memory_space<vmem>>, vector<1x1x128xf32>
    %77 = vector.shape_cast %76 : vector<1x1x128xf32> to vector<1x128xf32>
    %78 = arith.mulf %77, %11 : vector<1x128xf32>
    %79 = arith.addf %75, %78 : vector<1x128xf32>
    %c14_63 = arith.constant 14 : index
    %c0_64 = arith.constant 0 : index
    %c0_65 = arith.constant 0 : index
    %80 = vector.load %arg1[%c14_63, %c0_64, %c0_65] : memref<27x1x128xf32, #tpu.memory_space<vmem>>, vector<1x1x128xf32>
    %81 = vector.shape_cast %80 : vector<1x1x128xf32> to vector<1x128xf32>
    %82 = arith.mulf %81, %17 : vector<1x128xf32>
    %83 = arith.addf %79, %82 : vector<1x128xf32>
    %c15 = arith.constant 15 : index
    %c0_66 = arith.constant 0 : index
    %c0_67 = arith.constant 0 : index
    %84 = vector.load %arg1[%c15, %c0_66, %c0_67] : memref<27x1x128xf32, #tpu.memory_space<vmem>>, vector<1x1x128xf32>
    %85 = vector.shape_cast %84 : vector<1x1x128xf32> to vector<1x128xf32>
    %86 = arith.mulf %85, %1 : vector<1x128xf32>
    %c16 = arith.constant 16 : index
    %c0_68 = arith.constant 0 : index
    %c0_69 = arith.constant 0 : index
    %87 = vector.load %arg1[%c16, %c0_68, %c0_69] : memref<27x1x128xf32, #tpu.memory_space<vmem>>, vector<1x1x128xf32>
    %88 = vector.shape_cast %87 : vector<1x1x128xf32> to vector<1x128xf32>
    %89 = arith.mulf %88, %7 : vector<1x128xf32>
    %90 = arith.addf %86, %89 : vector<1x128xf32>
    %c17 = arith.constant 17 : index
    %c0_70 = arith.constant 0 : index
    %c0_71 = arith.constant 0 : index
    %91 = vector.load %arg1[%c17, %c0_70, %c0_71] : memref<27x1x128xf32, #tpu.memory_space<vmem>>, vector<1x1x128xf32>
    %92 = vector.shape_cast %91 : vector<1x1x128xf32> to vector<1x128xf32>
    %93 = arith.mulf %92, %13 : vector<1x128xf32>
    %94 = arith.addf %90, %93 : vector<1x128xf32>
    %c15_72 = arith.constant 15 : index
    %c0_73 = arith.constant 0 : index
    %c0_74 = arith.constant 0 : index
    %95 = vector.load %arg1[%c15_72, %c0_73, %c0_74] : memref<27x1x128xf32, #tpu.memory_space<vmem>>, vector<1x1x128xf32>
    %96 = vector.shape_cast %95 : vector<1x1x128xf32> to vector<1x128xf32>
    %97 = arith.mulf %96, %3 : vector<1x128xf32>
    %c16_75 = arith.constant 16 : index
    %c0_76 = arith.constant 0 : index
    %c0_77 = arith.constant 0 : index
    %98 = vector.load %arg1[%c16_75, %c0_76, %c0_77] : memref<27x1x128xf32, #tpu.memory_space<vmem>>, vector<1x1x128xf32>
    %99 = vector.shape_cast %98 : vector<1x1x128xf32> to vector<1x128xf32>
    %100 = arith.mulf %99, %9 : vector<1x128xf32>
    %101 = arith.addf %97, %100 : vector<1x128xf32>
    %c17_78 = arith.constant 17 : index
    %c0_79 = arith.constant 0 : index
    %c0_80 = arith.constant 0 : index
    %102 = vector.load %arg1[%c17_78, %c0_79, %c0_80] : memref<27x1x128xf32, #tpu.memory_space<vmem>>, vector<1x1x128xf32>
    %103 = vector.shape_cast %102 : vector<1x1x128xf32> to vector<1x128xf32>
    %104 = arith.mulf %103, %15 : vector<1x128xf32>
    %105 = arith.addf %101, %104 : vector<1x128xf32>
    %c15_81 = arith.constant 15 : index
    %c0_82 = arith.constant 0 : index
    %c0_83 = arith.constant 0 : index
    %106 = vector.load %arg1[%c15_81, %c0_82, %c0_83] : memref<27x1x128xf32, #tpu.memory_space<vmem>>, vector<1x1x128xf32>
    %107 = vector.shape_cast %106 : vector<1x1x128xf32> to vector<1x128xf32>
    %108 = arith.mulf %107, %5 : vector<1x128xf32>
    %c16_84 = arith.constant 16 : index
    %c0_85 = arith.constant 0 : index
    %c0_86 = arith.constant 0 : index
    %109 = vector.load %arg1[%c16_84, %c0_85, %c0_86] : memref<27x1x128xf32, #tpu.memory_space<vmem>>, vector<1x1x128xf32>
    %110 = vector.shape_cast %109 : vector<1x1x128xf32> to vector<1x128xf32>
    %111 = arith.mulf %110, %11 : vector<1x128xf32>
    %112 = arith.addf %108, %111 : vector<1x128xf32>
    %c17_87 = arith.constant 17 : index
    %c0_88 = arith.constant 0 : index
    %c0_89 = arith.constant 0 : index
    %113 = vector.load %arg1[%c17_87, %c0_88, %c0_89] : memref<27x1x128xf32, #tpu.memory_space<vmem>>, vector<1x1x128xf32>
    %114 = vector.shape_cast %113 : vector<1x1x128xf32> to vector<1x128xf32>
    %115 = arith.mulf %114, %17 : vector<1x128xf32>
    %116 = arith.addf %112, %115 : vector<1x128xf32>
    %c18 = arith.constant 18 : index
    %c0_90 = arith.constant 0 : index
    %c0_91 = arith.constant 0 : index
    %117 = vector.load %arg1[%c18, %c0_90, %c0_91] : memref<27x1x128xf32, #tpu.memory_space<vmem>>, vector<1x1x128xf32>
    %118 = vector.shape_cast %117 : vector<1x1x128xf32> to vector<1x128xf32>
    %119 = arith.mulf %118, %28 : vector<1x128xf32>
    %c19 = arith.constant 19 : index
    %c0_92 = arith.constant 0 : index
    %c0_93 = arith.constant 0 : index
    %120 = vector.load %arg1[%c19, %c0_92, %c0_93] : memref<27x1x128xf32, #tpu.memory_space<vmem>>, vector<1x1x128xf32>
    %121 = vector.shape_cast %120 : vector<1x1x128xf32> to vector<1x128xf32>
    %122 = arith.mulf %121, %61 : vector<1x128xf32>
    %123 = arith.addf %119, %122 : vector<1x128xf32>
    %c20 = arith.constant 20 : index
    %c0_94 = arith.constant 0 : index
    %c0_95 = arith.constant 0 : index
    %124 = vector.load %arg1[%c20, %c0_94, %c0_95] : memref<27x1x128xf32, #tpu.memory_space<vmem>>, vector<1x1x128xf32>
    %125 = vector.shape_cast %124 : vector<1x1x128xf32> to vector<1x128xf32>
    %126 = arith.mulf %125, %94 : vector<1x128xf32>
    %127 = arith.addf %123, %126 : vector<1x128xf32>
    %c18_96 = arith.constant 18 : index
    %c0_97 = arith.constant 0 : index
    %c0_98 = arith.constant 0 : index
    %128 = vector.load %arg1[%c18_96, %c0_97, %c0_98] : memref<27x1x128xf32, #tpu.memory_space<vmem>>, vector<1x1x128xf32>
    %129 = vector.shape_cast %128 : vector<1x1x128xf32> to vector<1x128xf32>
    %130 = arith.mulf %129, %39 : vector<1x128xf32>
    %c19_99 = arith.constant 19 : index
    %c0_100 = arith.constant 0 : index
    %c0_101 = arith.constant 0 : index
    %131 = vector.load %arg1[%c19_99, %c0_100, %c0_101] : memref<27x1x128xf32, #tpu.memory_space<vmem>>, vector<1x1x128xf32>
    %132 = vector.shape_cast %131 : vector<1x1x128xf32> to vector<1x128xf32>
    %133 = arith.mulf %132, %72 : vector<1x128xf32>
    %134 = arith.addf %130, %133 : vector<1x128xf32>
    %c20_102 = arith.constant 20 : index
    %c0_103 = arith.constant 0 : index
    %c0_104 = arith.constant 0 : index
    %135 = vector.load %arg1[%c20_102, %c0_103, %c0_104] : memref<27x1x128xf32, #tpu.memory_space<vmem>>, vector<1x1x128xf32>
    %136 = vector.shape_cast %135 : vector<1x1x128xf32> to vector<1x128xf32>
    %137 = arith.mulf %136, %105 : vector<1x128xf32>
    %138 = arith.addf %134, %137 : vector<1x128xf32>
    %c18_105 = arith.constant 18 : index
    %c0_106 = arith.constant 0 : index
    %c0_107 = arith.constant 0 : index
    %139 = vector.load %arg1[%c18_105, %c0_106, %c0_107] : memref<27x1x128xf32, #tpu.memory_space<vmem>>, vector<1x1x128xf32>
    %140 = vector.shape_cast %139 : vector<1x1x128xf32> to vector<1x128xf32>
    %141 = arith.mulf %140, %50 : vector<1x128xf32>
    %c19_108 = arith.constant 19 : index
    %c0_109 = arith.constant 0 : index
    %c0_110 = arith.constant 0 : index
    %142 = vector.load %arg1[%c19_108, %c0_109, %c0_110] : memref<27x1x128xf32, #tpu.memory_space<vmem>>, vector<1x1x128xf32>
    %143 = vector.shape_cast %142 : vector<1x1x128xf32> to vector<1x128xf32>
    %144 = arith.mulf %143, %83 : vector<1x128xf32>
    %145 = arith.addf %141, %144 : vector<1x128xf32>
    %c20_111 = arith.constant 20 : index
    %c0_112 = arith.constant 0 : index
    %c0_113 = arith.constant 0 : index
    %146 = vector.load %arg1[%c20_111, %c0_112, %c0_113] : memref<27x1x128xf32, #tpu.memory_space<vmem>>, vector<1x1x128xf32>
    %147 = vector.shape_cast %146 : vector<1x1x128xf32> to vector<1x128xf32>
    %148 = arith.mulf %147, %116 : vector<1x128xf32>
    %149 = arith.addf %145, %148 : vector<1x128xf32>
    %c21 = arith.constant 21 : index
    %c0_114 = arith.constant 0 : index
    %c0_115 = arith.constant 0 : index
    %150 = vector.load %arg1[%c21, %c0_114, %c0_115] : memref<27x1x128xf32, #tpu.memory_space<vmem>>, vector<1x1x128xf32>
    %151 = vector.shape_cast %150 : vector<1x1x128xf32> to vector<1x128xf32>
    %152 = arith.mulf %151, %28 : vector<1x128xf32>
    %c22 = arith.constant 22 : index
    %c0_116 = arith.constant 0 : index
    %c0_117 = arith.constant 0 : index
    %153 = vector.load %arg1[%c22, %c0_116, %c0_117] : memref<27x1x128xf32, #tpu.memory_space<vmem>>, vector<1x1x128xf32>
    %154 = vector.shape_cast %153 : vector<1x1x128xf32> to vector<1x128xf32>
    %155 = arith.mulf %154, %61 : vector<1x128xf32>
    %156 = arith.addf %152, %155 : vector<1x128xf32>
    %c23 = arith.constant 23 : index
    %c0_118 = arith.constant 0 : index
    %c0_119 = arith.constant 0 : index
    %157 = vector.load %arg1[%c23, %c0_118, %c0_119] : memref<27x1x128xf32, #tpu.memory_space<vmem>>, vector<1x1x128xf32>
    %158 = vector.shape_cast %157 : vector<1x1x128xf32> to vector<1x128xf32>
    %159 = arith.mulf %158, %94 : vector<1x128xf32>
    %160 = arith.addf %156, %159 : vector<1x128xf32>
    %c21_120 = arith.constant 21 : index
    %c0_121 = arith.constant 0 : index
    %c0_122 = arith.constant 0 : index
    %161 = vector.load %arg1[%c21_120, %c0_121, %c0_122] : memref<27x1x128xf32, #tpu.memory_space<vmem>>, vector<1x1x128xf32>
    %162 = vector.shape_cast %161 : vector<1x1x128xf32> to vector<1x128xf32>
    %163 = arith.mulf %162, %39 : vector<1x128xf32>
    %c22_123 = arith.constant 22 : index
    %c0_124 = arith.constant 0 : index
    %c0_125 = arith.constant 0 : index
    %164 = vector.load %arg1[%c22_123, %c0_124, %c0_125] : memref<27x1x128xf32, #tpu.memory_space<vmem>>, vector<1x1x128xf32>
    %165 = vector.shape_cast %164 : vector<1x1x128xf32> to vector<1x128xf32>
    %166 = arith.mulf %165, %72 : vector<1x128xf32>
    %167 = arith.addf %163, %166 : vector<1x128xf32>
    %c23_126 = arith.constant 23 : index
    %c0_127 = arith.constant 0 : index
    %c0_128 = arith.constant 0 : index
    %168 = vector.load %arg1[%c23_126, %c0_127, %c0_128] : memref<27x1x128xf32, #tpu.memory_space<vmem>>, vector<1x1x128xf32>
    %169 = vector.shape_cast %168 : vector<1x1x128xf32> to vector<1x128xf32>
    %170 = arith.mulf %169, %105 : vector<1x128xf32>
    %171 = arith.addf %167, %170 : vector<1x128xf32>
    %c21_129 = arith.constant 21 : index
    %c0_130 = arith.constant 0 : index
    %c0_131 = arith.constant 0 : index
    %172 = vector.load %arg1[%c21_129, %c0_130, %c0_131] : memref<27x1x128xf32, #tpu.memory_space<vmem>>, vector<1x1x128xf32>
    %173 = vector.shape_cast %172 : vector<1x1x128xf32> to vector<1x128xf32>
    %174 = arith.mulf %173, %50 : vector<1x128xf32>
    %c22_132 = arith.constant 22 : index
    %c0_133 = arith.constant 0 : index
    %c0_134 = arith.constant 0 : index
    %175 = vector.load %arg1[%c22_132, %c0_133, %c0_134] : memref<27x1x128xf32, #tpu.memory_space<vmem>>, vector<1x1x128xf32>
    %176 = vector.shape_cast %175 : vector<1x1x128xf32> to vector<1x128xf32>
    %177 = arith.mulf %176, %83 : vector<1x128xf32>
    %178 = arith.addf %174, %177 : vector<1x128xf32>
    %c23_135 = arith.constant 23 : index
    %c0_136 = arith.constant 0 : index
    %c0_137 = arith.constant 0 : index
    %179 = vector.load %arg1[%c23_135, %c0_136, %c0_137] : memref<27x1x128xf32, #tpu.memory_space<vmem>>, vector<1x1x128xf32>
    %180 = vector.shape_cast %179 : vector<1x1x128xf32> to vector<1x128xf32>
    %181 = arith.mulf %180, %116 : vector<1x128xf32>
    %182 = arith.addf %178, %181 : vector<1x128xf32>
    %c24 = arith.constant 24 : index
    %c0_138 = arith.constant 0 : index
    %c0_139 = arith.constant 0 : index
    %183 = vector.load %arg1[%c24, %c0_138, %c0_139] : memref<27x1x128xf32, #tpu.memory_space<vmem>>, vector<1x1x128xf32>
    %184 = vector.shape_cast %183 : vector<1x1x128xf32> to vector<1x128xf32>
    %185 = arith.mulf %184, %28 : vector<1x128xf32>
    %c25 = arith.constant 25 : index
    %c0_140 = arith.constant 0 : index
    %c0_141 = arith.constant 0 : index
    %186 = vector.load %arg1[%c25, %c0_140, %c0_141] : memref<27x1x128xf32, #tpu.memory_space<vmem>>, vector<1x1x128xf32>
    %187 = vector.shape_cast %186 : vector<1x1x128xf32> to vector<1x128xf32>
    %188 = arith.mulf %187, %61 : vector<1x128xf32>
    %189 = arith.addf %185, %188 : vector<1x128xf32>
    %c26 = arith.constant 26 : index
    %c0_142 = arith.constant 0 : index
    %c0_143 = arith.constant 0 : index
    %190 = vector.load %arg1[%c26, %c0_142, %c0_143] : memref<27x1x128xf32, #tpu.memory_space<vmem>>, vector<1x1x128xf32>
    %191 = vector.shape_cast %190 : vector<1x1x128xf32> to vector<1x128xf32>
    %192 = arith.mulf %191, %94 : vector<1x128xf32>
    %193 = arith.addf %189, %192 : vector<1x128xf32>
    %c24_144 = arith.constant 24 : index
    %c0_145 = arith.constant 0 : index
    %c0_146 = arith.constant 0 : index
    %194 = vector.load %arg1[%c24_144, %c0_145, %c0_146] : memref<27x1x128xf32, #tpu.memory_space<vmem>>, vector<1x1x128xf32>
    %195 = vector.shape_cast %194 : vector<1x1x128xf32> to vector<1x128xf32>
    %196 = arith.mulf %195, %39 : vector<1x128xf32>
    %c25_147 = arith.constant 25 : index
    %c0_148 = arith.constant 0 : index
    %c0_149 = arith.constant 0 : index
    %197 = vector.load %arg1[%c25_147, %c0_148, %c0_149] : memref<27x1x128xf32, #tpu.memory_space<vmem>>, vector<1x1x128xf32>
    %198 = vector.shape_cast %197 : vector<1x1x128xf32> to vector<1x128xf32>
    %199 = arith.mulf %198, %72 : vector<1x128xf32>
    %200 = arith.addf %196, %199 : vector<1x128xf32>
    %c26_150 = arith.constant 26 : index
    %c0_151 = arith.constant 0 : index
    %c0_152 = arith.constant 0 : index
    %201 = vector.load %arg1[%c26_150, %c0_151, %c0_152] : memref<27x1x128xf32, #tpu.memory_space<vmem>>, vector<1x1x128xf32>
    %202 = vector.shape_cast %201 : vector<1x1x128xf32> to vector<1x128xf32>
    %203 = arith.mulf %202, %105 : vector<1x128xf32>
    %204 = arith.addf %200, %203 : vector<1x128xf32>
    %c24_153 = arith.constant 24 : index
    %c0_154 = arith.constant 0 : index
    %c0_155 = arith.constant 0 : index
    %205 = vector.load %arg1[%c24_153, %c0_154, %c0_155] : memref<27x1x128xf32, #tpu.memory_space<vmem>>, vector<1x1x128xf32>
    %206 = vector.shape_cast %205 : vector<1x1x128xf32> to vector<1x128xf32>
    %207 = arith.mulf %206, %50 : vector<1x128xf32>
    %c25_156 = arith.constant 25 : index
    %c0_157 = arith.constant 0 : index
    %c0_158 = arith.constant 0 : index
    %208 = vector.load %arg1[%c25_156, %c0_157, %c0_158] : memref<27x1x128xf32, #tpu.memory_space<vmem>>, vector<1x1x128xf32>
    %209 = vector.shape_cast %208 : vector<1x1x128xf32> to vector<1x128xf32>
    %210 = arith.mulf %209, %83 : vector<1x128xf32>
    %211 = arith.addf %207, %210 : vector<1x128xf32>
    %c26_159 = arith.constant 26 : index
    %c0_160 = arith.constant 0 : index
    %c0_161 = arith.constant 0 : index
    %212 = vector.load %arg1[%c26_159, %c0_160, %c0_161] : memref<27x1x128xf32, #tpu.memory_space<vmem>>, vector<1x1x128xf32>
    %213 = vector.shape_cast %212 : vector<1x1x128xf32> to vector<1x128xf32>
    %214 = arith.mulf %213, %116 : vector<1x128xf32>
    %215 = arith.addf %211, %214 : vector<1x128xf32>
    %216 = arith.mulf %171, %215 : vector<1x128xf32>
    %217 = arith.mulf %182, %204 : vector<1x128xf32>
    %218 = arith.subf %216, %217 : vector<1x128xf32>
    %219 = arith.mulf %182, %193 : vector<1x128xf32>
    %220 = arith.mulf %160, %215 : vector<1x128xf32>
    %221 = arith.subf %219, %220 : vector<1x128xf32>
    %222 = arith.mulf %160, %204 : vector<1x128xf32>
    %223 = arith.mulf %171, %193 : vector<1x128xf32>
    %224 = arith.subf %222, %223 : vector<1x128xf32>
    %225 = arith.mulf %149, %204 : vector<1x128xf32>
    %226 = arith.mulf %138, %215 : vector<1x128xf32>
    %227 = arith.subf %225, %226 : vector<1x128xf32>
    %228 = arith.mulf %127, %215 : vector<1x128xf32>
    %229 = arith.mulf %149, %193 : vector<1x128xf32>
    %230 = arith.subf %228, %229 : vector<1x128xf32>
    %231 = arith.mulf %138, %193 : vector<1x128xf32>
    %232 = arith.mulf %127, %204 : vector<1x128xf32>
    %233 = arith.subf %231, %232 : vector<1x128xf32>
    %234 = arith.mulf %138, %182 : vector<1x128xf32>
    %235 = arith.mulf %149, %171 : vector<1x128xf32>
    %236 = arith.subf %234, %235 : vector<1x128xf32>
    %237 = arith.mulf %149, %160 : vector<1x128xf32>
    %238 = arith.mulf %127, %182 : vector<1x128xf32>
    %239 = arith.subf %237, %238 : vector<1x128xf32>
    %240 = arith.mulf %127, %171 : vector<1x128xf32>
    %241 = arith.mulf %138, %160 : vector<1x128xf32>
    %242 = arith.subf %240, %241 : vector<1x128xf32>
    %243 = arith.mulf %127, %218 : vector<1x128xf32>
    %244 = arith.mulf %138, %221 : vector<1x128xf32>
    %245 = arith.addf %243, %244 : vector<1x128xf32>
    %246 = arith.mulf %149, %224 : vector<1x128xf32>
    %247 = arith.addf %245, %246 : vector<1x128xf32>
    %248 = tpu.reciprocal %247 {approx = true} : vector<1x128xf32> -> vector<1x128xf32>
    %c0_162 = arith.constant 0 : index
    %c0_163 = arith.constant 0 : index
    %c0_164 = arith.constant 0 : index
    %249 = vector.load %arg3[%c0_162, %c0_163, %c0_164] : memref<9x1x128xf32, #tpu.memory_space<vmem>>, vector<1x1x128xf32>
    %250 = vector.shape_cast %249 : vector<1x1x128xf32> to vector<1x128xf32>
    %251 = arith.mulf %218, %250 : vector<1x128xf32>
    %c1_165 = arith.constant 1 : index
    %c0_166 = arith.constant 0 : index
    %c0_167 = arith.constant 0 : index
    %252 = vector.load %arg3[%c1_165, %c0_166, %c0_167] : memref<9x1x128xf32, #tpu.memory_space<vmem>>, vector<1x1x128xf32>
    %253 = vector.shape_cast %252 : vector<1x1x128xf32> to vector<1x128xf32>
    %254 = arith.mulf %221, %253 : vector<1x128xf32>
    %255 = arith.addf %251, %254 : vector<1x128xf32>
    %c2_168 = arith.constant 2 : index
    %c0_169 = arith.constant 0 : index
    %c0_170 = arith.constant 0 : index
    %256 = vector.load %arg3[%c2_168, %c0_169, %c0_170] : memref<9x1x128xf32, #tpu.memory_space<vmem>>, vector<1x1x128xf32>
    %257 = vector.shape_cast %256 : vector<1x1x128xf32> to vector<1x128xf32>
    %258 = arith.mulf %224, %257 : vector<1x128xf32>
    %259 = arith.addf %255, %258 : vector<1x128xf32>
    %c3_171 = arith.constant 3 : index
    %c0_172 = arith.constant 0 : index
    %c0_173 = arith.constant 0 : index
    %260 = vector.load %arg3[%c3_171, %c0_172, %c0_173] : memref<9x1x128xf32, #tpu.memory_space<vmem>>, vector<1x1x128xf32>
    %261 = vector.shape_cast %260 : vector<1x1x128xf32> to vector<1x128xf32>
    %262 = arith.mulf %227, %261 : vector<1x128xf32>
    %263 = arith.addf %259, %262 : vector<1x128xf32>
    %c4_174 = arith.constant 4 : index
    %c0_175 = arith.constant 0 : index
    %c0_176 = arith.constant 0 : index
    %264 = vector.load %arg3[%c4_174, %c0_175, %c0_176] : memref<9x1x128xf32, #tpu.memory_space<vmem>>, vector<1x1x128xf32>
    %265 = vector.shape_cast %264 : vector<1x1x128xf32> to vector<1x128xf32>
    %266 = arith.mulf %230, %265 : vector<1x128xf32>
    %267 = arith.addf %263, %266 : vector<1x128xf32>
    %c5_177 = arith.constant 5 : index
    %c0_178 = arith.constant 0 : index
    %c0_179 = arith.constant 0 : index
    %268 = vector.load %arg3[%c5_177, %c0_178, %c0_179] : memref<9x1x128xf32, #tpu.memory_space<vmem>>, vector<1x1x128xf32>
    %269 = vector.shape_cast %268 : vector<1x1x128xf32> to vector<1x128xf32>
    %270 = arith.mulf %233, %269 : vector<1x128xf32>
    %271 = arith.addf %267, %270 : vector<1x128xf32>
    %c6_180 = arith.constant 6 : index
    %c0_181 = arith.constant 0 : index
    %c0_182 = arith.constant 0 : index
    %272 = vector.load %arg3[%c6_180, %c0_181, %c0_182] : memref<9x1x128xf32, #tpu.memory_space<vmem>>, vector<1x1x128xf32>
    %273 = vector.shape_cast %272 : vector<1x1x128xf32> to vector<1x128xf32>
    %274 = arith.mulf %236, %273 : vector<1x128xf32>
    %275 = arith.addf %271, %274 : vector<1x128xf32>
    %c7_183 = arith.constant 7 : index
    %c0_184 = arith.constant 0 : index
    %c0_185 = arith.constant 0 : index
    %276 = vector.load %arg3[%c7_183, %c0_184, %c0_185] : memref<9x1x128xf32, #tpu.memory_space<vmem>>, vector<1x1x128xf32>
    %277 = vector.shape_cast %276 : vector<1x1x128xf32> to vector<1x128xf32>
    %278 = arith.mulf %239, %277 : vector<1x128xf32>
    %279 = arith.addf %275, %278 : vector<1x128xf32>
    %c8_186 = arith.constant 8 : index
    %c0_187 = arith.constant 0 : index
    %c0_188 = arith.constant 0 : index
    %280 = vector.load %arg3[%c8_186, %c0_187, %c0_188] : memref<9x1x128xf32, #tpu.memory_space<vmem>>, vector<1x1x128xf32>
    %281 = vector.shape_cast %280 : vector<1x1x128xf32> to vector<1x128xf32>
    %282 = arith.mulf %242, %281 : vector<1x128xf32>
    %283 = arith.addf %279, %282 : vector<1x128xf32>
    %284 = arith.mulf %283, %248 : vector<1x128xf32>
    %cst = arith.constant 1.000000e+00 : f32
    %285 = vector.broadcast %cst : f32 to vector<1x128xf32>
    %286 = arith.subf %284, %285 : vector<1x128xf32>
    %cst_189 = arith.constant 5.000000e-01 : f32
    %287 = vector.broadcast %cst_189 : f32 to vector<1x128xf32>
    %288 = arith.mulf %286, %287 : vector<1x128xf32>
    %c0_190 = arith.constant 0 : index
    %c0_191 = arith.constant 0 : index
    %289 = vector.load %arg5[%c0_190, %c0_191] : memref<1x128xf32, #tpu.memory_space<vmem>>, vector<1x128xf32>
    tpu.vector_store %arg5[%c0_190, %c0_191], %288 {strides = array<i32>} : memref<1x128xf32, #tpu.memory_space<vmem>>, vector<1x128xf32>,
    %cst_192 = arith.constant 0.000000e+00 : f32
    %290 = vector.broadcast %cst_192 : f32 to vector<1x128xf32>
    %c0_193 = arith.constant 0 : index
    %c0_194 = arith.constant 0 : index
    %c0_195 = arith.constant 0 : index
    %291 = vector.load %arg2[%c0_193, %c0_194, %c0_195] : memref<9x1x128xf32, #tpu.memory_space<vmem>>, vector<1x1x128xf32>
    %292 = vector.shape_cast %291 : vector<1x1x128xf32> to vector<1x128xf32>
    %293 = arith.addf %290, %292 : vector<1x128xf32>
    %c1_196 = arith.constant 1 : index
    %c0_197 = arith.constant 0 : index
    %c0_198 = arith.constant 0 : index
    %294 = vector.load %arg2[%c1_196, %c0_197, %c0_198] : memref<9x1x128xf32, #tpu.memory_space<vmem>>, vector<1x1x128xf32>
    %295 = vector.shape_cast %294 : vector<1x1x128xf32> to vector<1x128xf32>
    %296 = arith.addf %290, %295 : vector<1x128xf32>
    %c2_199 = arith.constant 2 : index
    %c0_200 = arith.constant 0 : index
    %c0_201 = arith.constant 0 : index
    %297 = vector.load %arg2[%c2_199, %c0_200, %c0_201] : memref<9x1x128xf32, #tpu.memory_space<vmem>>, vector<1x1x128xf32>
    %298 = vector.shape_cast %297 : vector<1x1x128xf32> to vector<1x128xf32>
    %299 = arith.addf %290, %298 : vector<1x128xf32>
    %c9_202 = arith.constant 9 : index
    %c0_203 = arith.constant 0 : index
    %c0_204 = arith.constant 0 : index
    %300 = vector.load %arg1[%c9_202, %c0_203, %c0_204] : memref<27x1x128xf32, #tpu.memory_space<vmem>>, vector<1x1x128xf32>
    %301 = vector.shape_cast %300 : vector<1x1x128xf32> to vector<1x128xf32>
    %302 = arith.mulf %301, %293 : vector<1x128xf32>
    %c10_205 = arith.constant 10 : index
    %c0_206 = arith.constant 0 : index
    %c0_207 = arith.constant 0 : index
    %303 = vector.load %arg1[%c10_205, %c0_206, %c0_207] : memref<27x1x128xf32, #tpu.memory_space<vmem>>, vector<1x1x128xf32>
    %304 = vector.shape_cast %303 : vector<1x1x128xf32> to vector<1x128xf32>
    %305 = arith.mulf %304, %296 : vector<1x128xf32>
    %306 = arith.addf %302, %305 : vector<1x128xf32>
    %c11_208 = arith.constant 11 : index
    %c0_209 = arith.constant 0 : index
    %c0_210 = arith.constant 0 : index
    %307 = vector.load %arg1[%c11_208, %c0_209, %c0_210] : memref<27x1x128xf32, #tpu.memory_space<vmem>>, vector<1x1x128xf32>
    %308 = vector.shape_cast %307 : vector<1x1x128xf32> to vector<1x128xf32>
    %309 = arith.mulf %308, %299 : vector<1x128xf32>
    %310 = arith.addf %306, %309 : vector<1x128xf32>
    %c12_211 = arith.constant 12 : index
    %c0_212 = arith.constant 0 : index
    %c0_213 = arith.constant 0 : index
    %311 = vector.load %arg1[%c12_211, %c0_212, %c0_213] : memref<27x1x128xf32, #tpu.memory_space<vmem>>, vector<1x1x128xf32>
    %312 = vector.shape_cast %311 : vector<1x1x128xf32> to vector<1x128xf32>
    %313 = arith.mulf %312, %293 : vector<1x128xf32>
    %c13_214 = arith.constant 13 : index
    %c0_215 = arith.constant 0 : index
    %c0_216 = arith.constant 0 : index
    %314 = vector.load %arg1[%c13_214, %c0_215, %c0_216] : memref<27x1x128xf32, #tpu.memory_space<vmem>>, vector<1x1x128xf32>
    %315 = vector.shape_cast %314 : vector<1x1x128xf32> to vector<1x128xf32>
    %316 = arith.mulf %315, %296 : vector<1x128xf32>
    %317 = arith.addf %313, %316 : vector<1x128xf32>
    %c14_217 = arith.constant 14 : index
    %c0_218 = arith.constant 0 : index
    %c0_219 = arith.constant 0 : index
    %318 = vector.load %arg1[%c14_217, %c0_218, %c0_219] : memref<27x1x128xf32, #tpu.memory_space<vmem>>, vector<1x1x128xf32>
    %319 = vector.shape_cast %318 : vector<1x1x128xf32> to vector<1x128xf32>
    %320 = arith.mulf %319, %299 : vector<1x128xf32>
    %321 = arith.addf %317, %320 : vector<1x128xf32>
    %c15_220 = arith.constant 15 : index
    %c0_221 = arith.constant 0 : index
    %c0_222 = arith.constant 0 : index
    %322 = vector.load %arg1[%c15_220, %c0_221, %c0_222] : memref<27x1x128xf32, #tpu.memory_space<vmem>>, vector<1x1x128xf32>
    %323 = vector.shape_cast %322 : vector<1x1x128xf32> to vector<1x128xf32>
    %324 = arith.mulf %323, %293 : vector<1x128xf32>
    %c16_223 = arith.constant 16 : index
    %c0_224 = arith.constant 0 : index
    %c0_225 = arith.constant 0 : index
    %325 = vector.load %arg1[%c16_223, %c0_224, %c0_225] : memref<27x1x128xf32, #tpu.memory_space<vmem>>, vector<1x1x128xf32>
    %326 = vector.shape_cast %325 : vector<1x1x128xf32> to vector<1x128xf32>
    %327 = arith.mulf %326, %296 : vector<1x128xf32>
    %328 = arith.addf %324, %327 : vector<1x128xf32>
    %c17_226 = arith.constant 17 : index
    %c0_227 = arith.constant 0 : index
    %c0_228 = arith.constant 0 : index
    %329 = vector.load %arg1[%c17_226, %c0_227, %c0_228] : memref<27x1x128xf32, #tpu.memory_space<vmem>>, vector<1x1x128xf32>
    %330 = vector.shape_cast %329 : vector<1x1x128xf32> to vector<1x128xf32>
    %331 = arith.mulf %330, %299 : vector<1x128xf32>
    %332 = arith.addf %328, %331 : vector<1x128xf32>
    %c3_229 = arith.constant 3 : index
    %c0_230 = arith.constant 0 : index
    %c0_231 = arith.constant 0 : index
    %333 = vector.load %arg2[%c3_229, %c0_230, %c0_231] : memref<9x1x128xf32, #tpu.memory_space<vmem>>, vector<1x1x128xf32>
    %334 = vector.shape_cast %333 : vector<1x1x128xf32> to vector<1x128xf32>
    %335 = arith.addf %310, %334 : vector<1x128xf32>
    %c4_232 = arith.constant 4 : index
    %c0_233 = arith.constant 0 : index
    %c0_234 = arith.constant 0 : index
    %336 = vector.load %arg2[%c4_232, %c0_233, %c0_234] : memref<9x1x128xf32, #tpu.memory_space<vmem>>, vector<1x1x128xf32>
    %337 = vector.shape_cast %336 : vector<1x1x128xf32> to vector<1x128xf32>
    %338 = arith.addf %321, %337 : vector<1x128xf32>
    %c5_235 = arith.constant 5 : index
    %c0_236 = arith.constant 0 : index
    %c0_237 = arith.constant 0 : index
    %339 = vector.load %arg2[%c5_235, %c0_236, %c0_237] : memref<9x1x128xf32, #tpu.memory_space<vmem>>, vector<1x1x128xf32>
    %340 = vector.shape_cast %339 : vector<1x1x128xf32> to vector<1x128xf32>
    %341 = arith.addf %332, %340 : vector<1x128xf32>
    %c18_238 = arith.constant 18 : index
    %c0_239 = arith.constant 0 : index
    %c0_240 = arith.constant 0 : index
    %342 = vector.load %arg1[%c18_238, %c0_239, %c0_240] : memref<27x1x128xf32, #tpu.memory_space<vmem>>, vector<1x1x128xf32>
    %343 = vector.shape_cast %342 : vector<1x1x128xf32> to vector<1x128xf32>
    %344 = arith.mulf %343, %335 : vector<1x128xf32>
    %c19_241 = arith.constant 19 : index
    %c0_242 = arith.constant 0 : index
    %c0_243 = arith.constant 0 : index
    %345 = vector.load %arg1[%c19_241, %c0_242, %c0_243] : memref<27x1x128xf32, #tpu.memory_space<vmem>>, vector<1x1x128xf32>
    %346 = vector.shape_cast %345 : vector<1x1x128xf32> to vector<1x128xf32>
    %347 = arith.mulf %346, %338 : vector<1x128xf32>
    %348 = arith.addf %344, %347 : vector<1x128xf32>
    %c20_244 = arith.constant 20 : index
    %c0_245 = arith.constant 0 : index
    %c0_246 = arith.constant 0 : index
    %349 = vector.load %arg1[%c20_244, %c0_245, %c0_246] : memref<27x1x128xf32, #tpu.memory_space<vmem>>, vector<1x1x128xf32>
    %350 = vector.shape_cast %349 : vector<1x1x128xf32> to vector<1x128xf32>
    %351 = arith.mulf %350, %341 : vector<1x128xf32>
    %352 = arith.addf %348, %351 : vector<1x128xf32>
    %c21_247 = arith.constant 21 : index
    %c0_248 = arith.constant 0 : index
    %c0_249 = arith.constant 0 : index
    %353 = vector.load %arg1[%c21_247, %c0_248, %c0_249] : memref<27x1x128xf32, #tpu.memory_space<vmem>>, vector<1x1x128xf32>
    %354 = vector.shape_cast %353 : vector<1x1x128xf32> to vector<1x128xf32>
    %355 = arith.mulf %354, %335 : vector<1x128xf32>
    %c22_250 = arith.constant 22 : index
    %c0_251 = arith.constant 0 : index
    %c0_252 = arith.constant 0 : index
    %356 = vector.load %arg1[%c22_250, %c0_251, %c0_252] : memref<27x1x128xf32, #tpu.memory_space<vmem>>, vector<1x1x128xf32>
    %357 = vector.shape_cast %356 : vector<1x1x128xf32> to vector<1x128xf32>
    %358 = arith.mulf %357, %338 : vector<1x128xf32>
    %359 = arith.addf %355, %358 : vector<1x128xf32>
    %c23_253 = arith.constant 23 : index
    %c0_254 = arith.constant 0 : index
    %c0_255 = arith.constant 0 : index
    %360 = vector.load %arg1[%c23_253, %c0_254, %c0_255] : memref<27x1x128xf32, #tpu.memory_space<vmem>>, vector<1x1x128xf32>
    %361 = vector.shape_cast %360 : vector<1x1x128xf32> to vector<1x128xf32>
    %362 = arith.mulf %361, %341 : vector<1x128xf32>
    %363 = arith.addf %359, %362 : vector<1x128xf32>
    %c24_256 = arith.constant 24 : index
    %c0_257 = arith.constant 0 : index
    %c0_258 = arith.constant 0 : index
    %364 = vector.load %arg1[%c24_256, %c0_257, %c0_258] : memref<27x1x128xf32, #tpu.memory_space<vmem>>, vector<1x1x128xf32>
    %365 = vector.shape_cast %364 : vector<1x1x128xf32> to vector<1x128xf32>
    %366 = arith.mulf %365, %335 : vector<1x128xf32>
    %c25_259 = arith.constant 25 : index
    %c0_260 = arith.constant 0 : index
    %c0_261 = arith.constant 0 : index
    %367 = vector.load %arg1[%c25_259, %c0_260, %c0_261] : memref<27x1x128xf32, #tpu.memory_space<vmem>>, vector<1x1x128xf32>
    %368 = vector.shape_cast %367 : vector<1x1x128xf32> to vector<1x128xf32>
    %369 = arith.mulf %368, %338 : vector<1x128xf32>
    %370 = arith.addf %366, %369 : vector<1x128xf32>
    %c26_262 = arith.constant 26 : index
    %c0_263 = arith.constant 0 : index
    %c0_264 = arith.constant 0 : index
    %371 = vector.load %arg1[%c26_262, %c0_263, %c0_264] : memref<27x1x128xf32, #tpu.memory_space<vmem>>, vector<1x1x128xf32>
    %372 = vector.shape_cast %371 : vector<1x1x128xf32> to vector<1x128xf32>
    %373 = arith.mulf %372, %341 : vector<1x128xf32>
    %374 = arith.addf %370, %373 : vector<1x128xf32>
    %c6_265 = arith.constant 6 : index
    %c0_266 = arith.constant 0 : index
    %c0_267 = arith.constant 0 : index
    %375 = vector.load %arg2[%c6_265, %c0_266, %c0_267] : memref<9x1x128xf32, #tpu.memory_space<vmem>>, vector<1x1x128xf32>
    %376 = vector.shape_cast %375 : vector<1x1x128xf32> to vector<1x128xf32>
    %377 = arith.addf %352, %376 : vector<1x128xf32>
    %c7_268 = arith.constant 7 : index
    %c0_269 = arith.constant 0 : index
    %c0_270 = arith.constant 0 : index
    %378 = vector.load %arg2[%c7_268, %c0_269, %c0_270] : memref<9x1x128xf32, #tpu.memory_space<vmem>>, vector<1x1x128xf32>
    %379 = vector.shape_cast %378 : vector<1x1x128xf32> to vector<1x128xf32>
    %380 = arith.addf %363, %379 : vector<1x128xf32>
    %c8_271 = arith.constant 8 : index
    %c0_272 = arith.constant 0 : index
    %c0_273 = arith.constant 0 : index
    %381 = vector.load %arg2[%c8_271, %c0_272, %c0_273] : memref<9x1x128xf32, #tpu.memory_space<vmem>>, vector<1x1x128xf32>
    %382 = vector.shape_cast %381 : vector<1x1x128xf32> to vector<1x128xf32>
    %383 = arith.addf %374, %382 : vector<1x128xf32>
    %c0_274 = arith.constant 0 : index
    %c0_275 = arith.constant 0 : index
    %c0_276 = arith.constant 0 : index
    %384 = vector.load %arg4[%c0_274, %c0_275, %c0_276] : memref<3x1x128xf32, #tpu.memory_space<vmem>>, vector<1x1x128xf32>
    %385 = vector.shape_cast %384 : vector<1x1x128xf32> to vector<1x128xf32>
    %386 = arith.subf %385, %377 : vector<1x128xf32>
    %c1_277 = arith.constant 1 : index
    %c0_278 = arith.constant 0 : index
    %c0_279 = arith.constant 0 : index
    %387 = vector.load %arg4[%c1_277, %c0_278, %c0_279] : memref<3x1x128xf32, #tpu.memory_space<vmem>>, vector<1x1x128xf32>
    %388 = vector.shape_cast %387 : vector<1x1x128xf32> to vector<1x128xf32>
    %389 = arith.subf %388, %380 : vector<1x128xf32>
    %c2_280 = arith.constant 2 : index
    %c0_281 = arith.constant 0 : index
    %c0_282 = arith.constant 0 : index
    %390 = vector.load %arg4[%c2_280, %c0_281, %c0_282] : memref<3x1x128xf32, #tpu.memory_space<vmem>>, vector<1x1x128xf32>
    %391 = vector.shape_cast %390 : vector<1x1x128xf32> to vector<1x128xf32>
    %392 = arith.subf %391, %383 : vector<1x128xf32>
    %393 = arith.mulf %386, %386 : vector<1x128xf32>
    %394 = arith.mulf %389, %389 : vector<1x128xf32>
    %395 = arith.addf %393, %394 : vector<1x128xf32>
    %396 = arith.mulf %392, %392 : vector<1x128xf32>
    %397 = arith.addf %395, %396 : vector<1x128xf32>
    %398 = math.sqrt %397 : vector<1x128xf32>
    %c0_283 = arith.constant 0 : index
    %c0_284 = arith.constant 0 : index
    %399 = vector.load %arg6[%c0_283, %c0_284] : memref<1x128xf32, #tpu.memory_space<vmem>>, vector<1x128xf32>
    tpu.vector_store %arg6[%c0_283, %c0_284], %398 {strides = array<i32>} : memref<1x128xf32, #tpu.memory_space<vmem>>, vector<1x128xf32>,
    return
  }
  func.func @transform_0(%arg0: i32) -> (i32, i32, i32) {
    %c0_i32 = arith.constant 0 : i32
    %c0_i32_0 = arith.constant 0 : i32
    %c0_i32_1 = arith.constant 0 : i32
    return %c0_i32, %arg0, %c0_i32_0 : i32, i32, i32
  }
  func.func @transform_1(%arg0: i32) -> (i32, i32, i32) {
    %c0_i32 = arith.constant 0 : i32
    %c0_i32_0 = arith.constant 0 : i32
    %c0_i32_1 = arith.constant 0 : i32
    return %c0_i32, %arg0, %c0_i32_0 : i32, i32, i32
  }
  func.func @transform_2(%arg0: i32) -> (i32, i32, i32) {
    %c0_i32 = arith.constant 0 : i32
    %c0_i32_0 = arith.constant 0 : i32
    %c0_i32_1 = arith.constant 0 : i32
    return %c0_i32, %arg0, %c0_i32_0 : i32, i32, i32
  }
  func.func @transform_3(%arg0: i32) -> (i32, i32, i32) {
    %c0_i32 = arith.constant 0 : i32
    %c0_i32_0 = arith.constant 0 : i32
    %c0_i32_1 = arith.constant 0 : i32
    return %c0_i32, %arg0, %c0_i32_0 : i32, i32, i32
  }
  func.func @transform_4(%arg0: i32) -> (i32, i32) {
    %c0_i32 = arith.constant 0 : i32
    %c0_i32_0 = arith.constant 0 : i32
    return %arg0, %c0_i32 : i32, i32
  }
  func.func @transform_5(%arg0: i32) -> (i32, i32) {
    %c0_i32 = arith.constant 0 : i32
    %c0_i32_0 = arith.constant 0 : i32
    return %arg0, %c0_i32 : i32, i32
  }
}

</mosaic_0001>

<llo_original>
// kernel: tpu_custom_call.1
$region0: #{tpu_custom_call.1}
  #allocation0 [shape = 'u32[]', space=smem, size = 0x4, offset = 0x4, fixed_abs, tag = 'smem constant byte address 0x4 - core index']
  #allocation1 [shape = 'u32[72,128]{1,0:T(1,128)}', space=vmem, size = 0x9000, scoped, tag = 'internal scratch']
  %s0 = inlined_call_operand.hbm [shape: f32[27,1,128], index: 0, kind: input, shape index: {}]
  %s1 = inlined_call_operand.hbm [shape: f32[9,1,128], index: 1, kind: input, shape index: {}]
  %s2 = inlined_call_operand.hbm [shape: f32[9,1,128], index: 2, kind: input, shape index: {}]
  %s3 = inlined_call_operand.hbm [shape: f32[3,1,128], index: 3, kind: input, shape index: {}]
  %s4 = inlined_call_operand.hbm [shape: f32[1,128], index: 4, kind: output, shape index: {0}]
  %s5 = inlined_call_operand.hbm [shape: f32[1,128], index: 5, kind: output, shape index: {1}]
  %6 = xla_tuple %s4, %s5
  %s7 = sld [smem:[#allocation0]]
  $region50: #{tpu_custom_call.1} parent=0
    _
  %s9 = ssub.s32 1, %s7
  %s10 = scalar_select 0, %s9, %s7
  $region1: #{tpu_custom_call.1} parent=0
    #allocation2 [shape = 'u8[13824]{0}', space=vmem, size = 0x3800, scoped, tag = 'input window, operand 0, single buffered']
    #allocation3 [shape = 's32[1]{0}', space=sflag, size = 0x4, scoped, tag = 'scoped memory for tpu_custom_call.1']
    #allocation4 [shape = 's32[1]{0}', space=sflag, size = 0x4, scoped, tag = 'scoped memory for tpu_custom_call.1']
    #allocation5 [shape = 'u8[4608]{0}', space=vmem, size = 0x1400, scoped, tag = 'input window, operand 1, single buffered']
    #allocation6 [shape = 's32[1]{0}', space=sflag, size = 0x4, scoped, tag = 'scoped memory for tpu_custom_call.1']
    #allocation7 [shape = 'u8[4608]{0}', space=vmem, size = 0x1400, scoped, tag = 'input window, operand 2, single buffered']
    #allocation8 [shape = 'u8[1536]{0}', space=vmem, size = 0x800, scoped, tag = 'input window, operand 3, single buffered']
    #allocation9 [shape = 's32[1]{0}', space=sflag, size = 0x4, scoped, tag = 'scoped memory for tpu_custom_call.1']
    #allocation10 [shape = 'u8[512]{0}', space=vmem, size = 0x400, scoped, tag = 'output window, operand 0, single buffered']
    #allocation11 [shape = 'u8[512]{0}', space=vmem, size = 0x400, scoped, tag = 'output window, operand 1, single buffered']
    #allocation12 [shape = 's32[1]{0}', space=sflag, size = 0x4, scoped, tag = 'scoped memory for tpu_custom_call.1']
    %11 = vsyncpa [#allocation3], 0
    %12 = vsyncpa [#allocation6], 0
    %13 = vsyncpa [#allocation9], 0
    %14 = vsyncpa [#allocation4], 0
    %15 = vsyncpa [#allocation12], 0
    // Predicated region
    $region2: #{tpu_custom_call.1} parent=1 // pred_check
      _
    $region3: #{tpu_custom_call.1} parent=1 // pred_check_branch
      %17 = sbr.rel (0) target = $region5
    $region4: #{tpu_custom_call.1} parent=1 // pred_region
      %19 = vsyncadd [#allocation3], 0
      %s20 = sshll.u32 %s0, 4
      %s21 = int_to_ptr.hbm [resolvable:$true] %s20
      %s22 = sshll.u32 [#allocation2], 4
      %s23 = int_to_ptr.vmem [resolvable:$true] %s22
      %28 = dma.hbm_to_vmem [thread:$0]  %s21, 432, %s23, [#allocation3], 16, 16, 1
    $region5: #{tpu_custom_call.1} parent=1 // pred_fallthru
      _
    // Predicated region
    $region6: #{tpu_custom_call.1} parent=1 // pred_check
      _
    $region7: #{tpu_custom_call.1} parent=1 // pred_check_branch
      %30 = sbr.rel (0) target = $region9
    $region8: #{tpu_custom_call.1} parent=1 // pred_region
      %32 = vsyncadd [#allocation6], 0
      %s33 = sshll.u32 %s1, 4
      %s34 = int_to_ptr.hbm [resolvable:$true] %s33
      %s35 = sshll.u32 [#allocation5], 4
      %s36 = int_to_ptr.vmem [resolvable:$true] %s35
      %41 = dma.hbm_to_vmem [thread:$0]  %s34, 144, %s36, [#allocation6], 16, 16, 1
    $region9: #{tpu_custom_call.1} parent=1 // pred_fallthru
      _
    // Predicated region
    $region10: #{tpu_custom_call.1} parent=1 // pred_check
      _
    $region11: #{tpu_custom_call.1} parent=1 // pred_check_branch
      %43 = sbr.rel (0) target = $region13
    $region12: #{tpu_custom_call.1} parent=1 // pred_region
      %45 = vsyncadd [#allocation6], 0
      %s46 = sshll.u32 %s2, 4
      %s47 = int_to_ptr.hbm [resolvable:$true] %s46
      %s48 = sshll.u32 [#allocation7], 4
      %s49 = int_to_ptr.vmem [resolvable:$true] %s48
      %54 = dma.hbm_to_vmem [thread:$0]  %s47, 144, %s49, [#allocation6], 16, 16, 1
    $region13: #{tpu_custom_call.1} parent=1 // pred_fallthru
      _
    // Predicated region
    $region14: #{tpu_custom_call.1} parent=1 // pred_check
      _
    $region15: #{tpu_custom_call.1} parent=1 // pred_check_branch
      %56 = sbr.rel (0) target = $region17
    $region16: #{tpu_custom_call.1} parent=1 // pred_region
      %58 = vsyncadd [#allocation9], 0
      %s59 = sshll.u32 %s3, 4
      %s60 = int_to_ptr.hbm [resolvable:$true] %s59
      %s61 = sshll.u32 [#allocation8], 4
      %s62 = int_to_ptr.vmem [resolvable:$true] %s61
      %67 = dma.hbm_to_vmem [thread:$0]  %s60, 48, %s62, [#allocation9], 16, 16, 1
    $region17: #{tpu_custom_call.1} parent=1 // pred_fallthru
      _
    // Predicated region
    $region18: #{tpu_custom_call.1} parent=1 // pred_check
      _
    $region19: #{tpu_custom_call.1} parent=1 // pred_check_branch
      %69 = sbr.rel (0) target = $region21
    $region20: #{tpu_custom_call.1} parent=1 // pred_region
      %71 = dma.done [#allocation3], 432
    $region21: #{tpu_custom_call.1} parent=1 // pred_fallthru
      _
    // Predicated region
    $region22: #{tpu_custom_call.1} parent=1 // pred_check
      _
    $region23: #{tpu_custom_call.1} parent=1 // pred_check_branch
      %73 = sbr.rel (0) target = $region25
    $region24: #{tpu_custom_call.1} parent=1 // pred_region
      %75 = dma.done [#allocation6], 144
    $region25: #{tpu_custom_call.1} parent=1 // pred_fallthru
      _
    // Predicated region
    $region26: #{tpu_custom_call.1} parent=1 // pred_check
      _
    $region27: #{tpu_custom_call.1} parent=1 // pred_check_branch
      %77 = sbr.rel (0) target = $region29
    $region28: #{tpu_custom_call.1} parent=1 // pred_region
      %79 = dma.done [#allocation6], 144
    $region29: #{tpu_custom_call.1} parent=1 // pred_fallthru
      _
    // Predicated region
    $region30: #{tpu_custom_call.1} parent=1 // pred_check
      _
    $region31: #{tpu_custom_call.1} parent=1 // pred_check_branch
      %81 = sbr.rel (0) target = $region33
    $region32: #{tpu_custom_call.1} parent=1 // pred_region
      %83 = dma.done [#allocation9], 48
    $region33: #{tpu_custom_call.1} parent=1 // pred_fallthru
      _
    %v84 = vld [vmem:[#allocation2] sm:$0x1]
    %s85 = scalar_lea.vmem [#allocation2], 1
    %v86 = vld [vmem:[%s85] sm:$0x1]
    %s87 = scalar_lea.vmem [#allocation2], 2
    %v88 = vld [vmem:[%s87] sm:$0x1]
    %s89 = scalar_lea.vmem [#allocation2], 3
    %v90 = vld [vmem:[%s89] sm:$0x1]
    %s91 = scalar_lea.vmem [#allocation2], 4
    %v92 = vld [vmem:[%s91] sm:$0x1]
    %s93 = scalar_lea.vmem [#allocation2], 5
    %v94 = vld [vmem:[%s93] sm:$0x1]
    %s95 = scalar_lea.vmem [#allocation2], 6
    %v96 = vld [vmem:[%s95] sm:$0x1]
    %s97 = scalar_lea.vmem [#allocation2], 7
    %v98 = vld [vmem:[%s97] sm:$0x1]
    %s99 = scalar_lea.vmem [#allocation2], 8
    %v100 = vld [vmem:[%s99] sm:$0x1]
    %s101 = scalar_lea.vmem [#allocation2], 9
    %v102 = vld [vmem:[%s101] sm:$0x1]
    %v103 = vmul.f32 %v102, %v84
    %s104 = scalar_lea.vmem [#allocation2], 10
    %v105 = vld [vmem:[%s104] sm:$0x1]
    %v106 = vmul.f32 %v105, %v90
    %v107 = vadd.f32 %v103, %v106
    %s108 = scalar_lea.vmem [#allocation2], 11
    %v109 = vld [vmem:[%s108] sm:$0x1]
    %v110 = vmul.f32 %v109, %v96
    %v111 = vadd.f32 %v107, %v110
    %v112 = vmul.f32 %v102, %v86
    %v113 = vmul.f32 %v105, %v92
    %v114 = vadd.f32 %v112, %v113
    %v115 = vmul.f32 %v109, %v98
    %v116 = vadd.f32 %v114, %v115
    %v117 = vmul.f32 %v102, %v88
    %v118 = vmul.f32 %v105, %v94
    %v119 = vadd.f32 %v117, %v118
    %v120 = vmul.f32 %v109, %v100
    %v121 = vadd.f32 %v119, %v120
    %s122 = scalar_lea.vmem [#allocation2], 12
    %v123 = vld [vmem:[%s122] sm:$0x1]
    %v124 = vmul.f32 %v123, %v84
    %s125 = scalar_lea.vmem [#allocation2], 13
    %v126 = vld [vmem:[%s125] sm:$0x1]
    %v127 = vmul.f32 %v126, %v90
    %v128 = vadd.f32 %v124, %v127
    %s129 = scalar_lea.vmem [#allocation2], 14
    %v130 = vld [vmem:[%s129] sm:$0x1]
    %v131 = vmul.f32 %v130, %v96
    %v132 = vadd.f32 %v128, %v131
    %v133 = vmul.f32 %v123, %v86
    %v134 = vmul.f32 %v126, %v92
    %v135 = vadd.f32 %v133, %v134
    %v136 = vmul.f32 %v130, %v98
    %v137 = vadd.f32 %v135, %v136
    %v138 = vmul.f32 %v123, %v88
    %v139 = vmul.f32 %v126, %v94
    %v140 = vadd.f32 %v138, %v139
    %v141 = vmul.f32 %v130, %v100
    %v142 = vadd.f32 %v140, %v141
    %s143 = scalar_lea.vmem [#allocation2], 15
    %v144 = vld [vmem:[%s143] sm:$0x1]
    %v145 = vmul.f32 %v144, %v84
    %s146 = scalar_lea.vmem [#allocation2], 16
    %v147 = vld [vmem:[%s146] sm:$0x1]
    %v148 = vmul.f32 %v147, %v90
    %v149 = vadd.f32 %v145, %v148
    %s150 = scalar_lea.vmem [#allocation2], 17
    %v151 = vld [vmem:[%s150] sm:$0x1]
    %v152 = vmul.f32 %v151, %v96
    %v153 = vadd.f32 %v149, %v152
    %v154 = vmul.f32 %v144, %v86
    %v155 = vmul.f32 %v147, %v92
    %v156 = vadd.f32 %v154, %v155
    %v157 = vmul.f32 %v151, %v98
    %v158 = vadd.f32 %v156, %v157
    %v159 = vmul.f32 %v144, %v88
    %v160 = vmul.f32 %v147, %v94
    %v161 = vadd.f32 %v159, %v160
    %v162 = vmul.f32 %v151, %v100
    %v163 = vadd.f32 %v161, %v162
    %s164 = scalar_lea.vmem [#allocation2], 18
    %v165 = vld [vmem:[%s164] sm:$0x1]
    %v166 = vmul.f32 %v165, %v111
    %s167 = scalar_lea.vmem [#allocation2], 19
    %v168 = vld [vmem:[%s167] sm:$0x1]
    %v169 = vmul.f32 %v168, %v132
    %v170 = vadd.f32 %v166, %v169
    %s171 = scalar_lea.vmem [#allocation2], 20
    %v172 = vld [vmem:[%s171] sm:$0x1]
    %v173 = vmul.f32 %v172, %v153
    %v174 = vadd.f32 %v170, %v173
    %v175 = vmul.f32 %v165, %v116
    %v176 = vmul.f32 %v168, %v137
    %v177 = vadd.f32 %v175, %v176
    %v178 = vmul.f32 %v172, %v158
    %v179 = vadd.f32 %v177, %v178
    %v180 = vmul.f32 %v165, %v121
    %v181 = vmul.f32 %v168, %v142
    %v182 = vadd.f32 %v180, %v181
    %v183 = vmul.f32 %v172, %v163
    %v184 = vadd.f32 %v182, %v183
    %s185 = scalar_lea.vmem [#allocation2], 21
    %v186 = vld [vmem:[%s185] sm:$0x1]
    %v187 = vmul.f32 %v186, %v111
    %s188 = scalar_lea.vmem [#allocation2], 22
    %v189 = vld [vmem:[%s188] sm:$0x1]
    %v190 = vmul.f32 %v189, %v132
    %v191 = vadd.f32 %v187, %v190
    %s192 = scalar_lea.vmem [#allocation2], 23
    %v193 = vld [vmem:[%s192] sm:$0x1]
    %v194 = vmul.f32 %v193, %v153
    %v195 = vadd.f32 %v191, %v194
    %v196 = vmul.f32 %v186, %v116
    %v197 = vmul.f32 %v189, %v137
    %v198 = vadd.f32 %v196, %v197
    %v199 = vmul.f32 %v193, %v158
    %v200 = vadd.f32 %v198, %v199
    %v201 = vmul.f32 %v186, %v121
    %v202 = vmul.f32 %v189, %v142
    %v203 = vadd.f32 %v201, %v202
    %v204 = vmul.f32 %v193, %v163
    %v205 = vadd.f32 %v203, %v204
    %s206 = scalar_lea.vmem [#allocation2], 24
    %v207 = vld [vmem:[%s206] sm:$0x1]
    %v208 = vmul.f32 %v207, %v111
    %s209 = scalar_lea.vmem [#allocation2], 25
    %v210 = vld [vmem:[%s209] sm:$0x1]
    %v211 = vmul.f32 %v210, %v132
    %v212 = vadd.f32 %v208, %v211
    %s213 = scalar_lea.vmem [#allocation2], 26
    %v214 = vld [vmem:[%s213] sm:$0x1]
    %v215 = vmul.f32 %v214, %v153
    %v216 = vadd.f32 %v212, %v215
    %v217 = vmul.f32 %v207, %v116
    %v218 = vmul.f32 %v210, %v137
    %v219 = vadd.f32 %v217, %v218
    %v220 = vmul.f32 %v214, %v158
    %v221 = vadd.f32 %v219, %v220
    %v222 = vmul.f32 %v207, %v121
    %v223 = vmul.f32 %v210, %v142
    %v224 = vadd.f32 %v222, %v223
    %v225 = vmul.f32 %v214, %v163
    %v226 = vadd.f32 %v224, %v225
    %v227 = vmul.f32 %v200, %v226
    %v228 = vmul.f32 %v205, %v221
    %v229 = vsub.f32 %v227, %v228
    %v230 = vmul.f32 %v205, %v216
    %v231 = vmul.f32 %v195, %v226
    %v232 = vsub.f32 %v230, %v231
    %v233 = vmul.f32 %v195, %v221
    %v234 = vmul.f32 %v200, %v216
    %v235 = vsub.f32 %v233, %v234
    %v236 = vmul.f32 %v184, %v221
    %v237 = vmul.f32 %v179, %v226
    %v238 = vsub.f32 %v236, %v237
    %v239 = vmul.f32 %v174, %v226
    %v240 = vmul.f32 %v184, %v216
    %v241 = vsub.f32 %v239, %v240
    %v242 = vmul.f32 %v179, %v216
    %v243 = vmul.f32 %v174, %v221
    %v244 = vsub.f32 %v242, %v243
    %v245 = vmul.f32 %v179, %v205
    %v246 = vmul.f32 %v184, %v200
    %v247 = vsub.f32 %v245, %v246
    %v248 = vmul.f32 %v184, %v195
    %v249 = vmul.f32 %v174, %v205
    %v250 = vsub.f32 %v248, %v249
    %v251 = vmul.f32 %v174, %v200
    %v252 = vmul.f32 %v179, %v195
    %v253 = vsub.f32 %v251, %v252
    %v254 = vmul.f32 %v174, %v229
    %v255 = vmul.f32 %v179, %v232
    %v256 = vadd.f32 %v254, %v255
    %v257 = vmul.f32 %v184, %v235
    %v258 = vadd.f32 %v256, %v257
    %v259 = vrcp.pop %v258
    %v260 = vld [vmem:[#allocation7] sm:$0x1]
    %v261 = vmul.f32 %v229, %v260
    %s262 = scalar_lea.vmem [#allocation7], 1
    %v263 = vld [vmem:[%s262] sm:$0x1]
    %v264 = vmul.f32 %v232, %v263
    %v265 = vadd.f32 %v261, %v264
    %s266 = scalar_lea.vmem [#allocation7], 2
    %v267 = vld [vmem:[%s266] sm:$0x1]
    %v268 = vmul.f32 %v235, %v267
    %v269 = vadd.f32 %v265, %v268
    %s270 = scalar_lea.vmem [#allocation7], 3
    %v271 = vld [vmem:[%s270] sm:$0x1]
    %v272 = vmul.f32 %v238, %v271
    %v273 = vadd.f32 %v269, %v272
    %s274 = scalar_lea.vmem [#allocation7], 4
    %v275 = vld [vmem:[%s274] sm:$0x1]
    %v276 = vmul.f32 %v241, %v275
    %v277 = vadd.f32 %v273, %v276
    %s278 = scalar_lea.vmem [#allocation7], 5
    %v279 = vld [vmem:[%s278] sm:$0x1]
    %v280 = vmul.f32 %v244, %v279
    %v281 = vadd.f32 %v277, %v280
    %s282 = scalar_lea.vmem [#allocation7], 6
    %v283 = vld [vmem:[%s282] sm:$0x1]
    %v284 = vmul.f32 %v247, %v283
    %v285 = vadd.f32 %v281, %v284
    %s286 = scalar_lea.vmem [#allocation7], 7
    %v287 = vld [vmem:[%s286] sm:$0x1]
    %v288 = vmul.f32 %v250, %v287
    %v289 = vadd.f32 %v285, %v288
    %s290 = scalar_lea.vmem [#allocation7], 8
    %v291 = vld [vmem:[%s290] sm:$0x1]
    %v292 = vmul.f32 %v253, %v291
    %v293 = vadd.f32 %v289, %v292
    %v294 = vmul.f32 %v293, %v259
    %v295 = vsub.f32 %v294, 1.0
    %v296 = vmul.f32 %v295, 0.5
    %297 = vst [vmem:[#allocation10] sm:$0x1] %v296
    %v298 = vld [vmem:[#allocation5] sm:$0x1]
    %v299 = vadd.f32 %v298, 0.0
    %s300 = scalar_lea.vmem [#allocation5], 1
    %v301 = vld [vmem:[%s300] sm:$0x1]
    %v302 = vadd.f32 %v301, 0.0
    %s303 = scalar_lea.vmem [#allocation5], 2
    %v304 = vld [vmem:[%s303] sm:$0x1]
    %v305 = vadd.f32 %v304, 0.0
    %v306 = vld [vmem:[%s101] sm:$0x1]
    %v307 = vmul.f32 %v306, %v299
    %v308 = vld [vmem:[%s104] sm:$0x1]
    %v309 = vmul.f32 %v308, %v302
    %v310 = vadd.f32 %v307, %v309
    %v311 = vld [vmem:[%s108] sm:$0x1]
    %v312 = vmul.f32 %v311, %v305
    %v313 = vadd.f32 %v310, %v312
    %v314 = vld [vmem:[%s122] sm:$0x1]
    %v315 = vmul.f32 %v314, %v299
    %v316 = vld [vmem:[%s125] sm:$0x1]
    %v317 = vmul.f32 %v316, %v302
    %v318 = vadd.f32 %v315, %v317
    %v319 = vld [vmem:[%s129] sm:$0x1]
    %v320 = vmul.f32 %v319, %v305
    %v321 = vadd.f32 %v318, %v320
    %v322 = vld [vmem:[%s143] sm:$0x1]
    %v323 = vmul.f32 %v322, %v299
    %v324 = vld [vmem:[%s146] sm:$0x1]
    %v325 = vmul.f32 %v324, %v302
    %v326 = vadd.f32 %v323, %v325
    %v327 = vld [vmem:[%s150] sm:$0x1]
    %v328 = vmul.f32 %v327, %v305
    %v329 = vadd.f32 %v326, %v328
    %s330 = scalar_lea.vmem [#allocation5], 3
    %v331 = vld [vmem:[%s330] sm:$0x1]
    %v332 = vadd.f32 %v313, %v331
    %s333 = scalar_lea.vmem [#allocation5], 4
    %v334 = vld [vmem:[%s333] sm:$0x1]
    %v335 = vadd.f32 %v321, %v334
    %s336 = scalar_lea.vmem [#allocation5], 5
    %v337 = vld [vmem:[%s336] sm:$0x1]
    %v338 = vadd.f32 %v329, %v337
    %v339 = vld [vmem:[%s164] sm:$0x1]
    %v340 = vmul.f32 %v339, %v332
    %v341 = vld [vmem:[%s167] sm:$0x1]
    %v342 = vmul.f32 %v341, %v335
    %v343 = vadd.f32 %v340, %v342
    %v344 = vld [vmem:[%s171] sm:$0x1]
    %v345 = vmul.f32 %v344, %v338
    %v346 = vadd.f32 %v343, %v345
    %v347 = vld [vmem:[%s185] sm:$0x1]
    %v348 = vmul.f32 %v347, %v332
    %v349 = vld [vmem:[%s188] sm:$0x1]
    %v350 = vmul.f32 %v349, %v335
    %v351 = vadd.f32 %v348, %v350
    %v352 = vld [vmem:[%s192] sm:$0x1]
    %v353 = vmul.f32 %v352, %v338
    %v354 = vadd.f32 %v351, %v353
    %v355 = vld [vmem:[%s206] sm:$0x1]
    %v356 = vmul.f32 %v355, %v332
    %v357 = vld [vmem:[%s209] sm:$0x1]
    %v358 = vmul.f32 %v357, %v335
    %v359 = vadd.f32 %v356, %v358
    %v360 = vld [vmem:[%s213] sm:$0x1]
    %v361 = vmul.f32 %v360, %v338
    %v362 = vadd.f32 %v359, %v361
    %s363 = scalar_lea.vmem [#allocation5], 6
    %v364 = vld [vmem:[%s363] sm:$0x1]
    %v365 = vadd.f32 %v346, %v364
    %s366 = scalar_lea.vmem [#allocation5], 7
    %v367 = vld [vmem:[%s366] sm:$0x1]
    %v368 = vadd.f32 %v354, %v367
    %s369 = scalar_lea.vmem [#allocation5], 8
    %v370 = vld [vmem:[%s369] sm:$0x1]
    %v371 = vadd.f32 %v362, %v370
    %v372 = vld [vmem:[#allocation8] sm:$0x1]
    %v373 = vsub.f32 %v372, %v365
    %s374 = scalar_lea.vmem [#allocation8], 1
    %v375 = vld [vmem:[%s374] sm:$0x1]
    %v376 = vsub.f32 %v375, %v368
    %s377 = scalar_lea.vmem [#allocation8], 2
    %v378 = vld [vmem:[%s377] sm:$0x1]
    %v379 = vsub.f32 %v378, %v371
    %v380 = vmul.f32 %v373, %v373
    %v381 = vmul.f32 %v376, %v376
    %v382 = vadd.f32 %v380, %v381
    %v383 = vmul.f32 %v379, %v379
    %v384 = vadd.f32 %v382, %v383
    %v385 = vrsqrt.pop %v384
    %v386 = vmul.f32 %v385, %v384
    %v387 = vmul.f32 %v386, %v385
    %v388 = vmul.f32 0.5, %v387
    %v389 = vsub.f32 1.5, %v388
    %v390 = vmul.f32 %v385, %v389
    %v391 = vmul.f32 %v384, %v390
    %vm392 = vcmp.eq.f32.partialorder %v384, inf
    %v393 = vsel %vm392, %v384, %v391
    %vm394 = vcmp.eq.f32.partialorder %v384, 0.0
    %v395 = vand.u32 %v384, 2147483648
    %v396 = vsel %vm394, %v395, %v393
    %397 = vst [vmem:[#allocation11] sm:$0x1] %v396
    // Predicated region
    $region34: #{tpu_custom_call.1} parent=1 // pred_check
      _
    $region35: #{tpu_custom_call.1} parent=1 // pred_check_branch
      %399 = sbr.rel (0) target = $region37
    $region36: #{tpu_custom_call.1} parent=1 // pred_region
      %401 = vsyncadd [#allocation4], 0
      %s403 = sshll.u32 [#allocation10], 4
      %s404 = int_to_ptr.vmem [resolvable:$true] %s403
      %s405 = sshll.u32 %s4, 4
      %s406 = int_to_ptr.hbm [resolvable:$true] %s405
      %408 = dma.vmem_to_hbm [thread:$0]  %s404, 16, %s406, [#allocation4]
    $region37: #{tpu_custom_call.1} parent=1 // pred_fallthru
      _
    // Predicated region
    $region38: #{tpu_custom_call.1} parent=1 // pred_check
      _
    $region39: #{tpu_custom_call.1} parent=1 // pred_check_branch
      %410 = sbr.rel (0) target = $region41
    $region40: #{tpu_custom_call.1} parent=1 // pred_region
      %412 = vsyncadd [#allocation12], 0
      %s414 = sshll.u32 [#allocation11], 4
      %s415 = int_to_ptr.vmem [resolvable:$true] %s414
      %s416 = sshll.u32 %s5, 4
      %s417 = int_to_ptr.hbm [resolvable:$true] %s416
      %419 = dma.vmem_to_hbm [thread:$0]  %s415, 16, %s417, [#allocation12]
    $region41: #{tpu_custom_call.1} parent=1 // pred_fallthru
      _
    // Predicated region
    $region42: #{tpu_custom_call.1} parent=1 // pred_check
      _
    $region43: #{tpu_custom_call.1} parent=1 // pred_check_branch
      %421 = sbr.rel (0) target = $region45
    $region44: #{tpu_custom_call.1} parent=1 // pred_region
      %423 = dma.done [#allocation4], 16
    $region45: #{tpu_custom_call.1} parent=1 // pred_fallthru
      _
    // Predicated region
    $region46: #{tpu_custom_call.1} parent=1 // pred_check
      _
    $region47: #{tpu_custom_call.1} parent=1 // pred_check_branch
      %425 = sbr.rel (0) target = $region49
    $region48: #{tpu_custom_call.1} parent=1 // pred_region
      %427 = dma.done [#allocation12], 16
    $region49: #{tpu_custom_call.1} parent=1 // pred_fallthru
      _
    %428 = vsyncpa [#allocation3], 1
    %429 = vsyncpa [#allocation6], 1
    %430 = vsyncpa [#allocation9], 1
    %431 = vsyncpa [#allocation4], 1
    %432 = vsyncpa [#allocation12], 1

</llo_original>
